<compile_context>
chip_gen: v7x
topology: tpu7x:2x2x1
jax: 0.10.0
libtpu: 0.0.40
codegen_flags: <defaults>
</compile_context>

<pallas_src>
import functools
import math

import jax
import jax.numpy as jnp
from jax.experimental import pallas as pl
from jax.experimental.pallas import tpu as pltpu


def _agg_mhattn_kernel(x_ref, wkt_ref, qbd_ref, exp_ref, s_ref, cls_ref,
                       *, total_rows, mask_tail):
    rows, _ = x_ref.shape                     # rows = block_n * p
    h = qbd_ref.shape[-1]
    bn = s_ref.shape[0]
    p = rows // bn

    x = x_ref[...]                            # (rows, D), input/compute dtype

    if mask_tail:
        # Partial last block: zero out-of-range rows so garbage (possibly NaN)
        # never reaches the pooling matmul (0 * NaN = NaN would contaminate it).
        rid = (jax.lax.broadcasted_iota(jnp.int32, (rows, 1), 0)
               + pl.program_id(0) * rows)
        x = jnp.where(rid < total_rows, x, 0)

    # proj_k: Linear(in_dim, in_dim, bias=False) -> Dropout(eval) -> ReLU
    k = jnp.maximum(
        jnp.dot(x, wkt_ref[...], preferred_element_type=jnp.float32), 0.0)

    # Per-head logits via block-diagonal Q: (rows, D) @ (D, h)
    a = jnp.dot(k.astype(qbd_ref.dtype), qbd_ref[...],
                preferred_element_type=jnp.float32)                  # (rows, h)

    # zero-std rows == all-equal feature rows: cheap max==min test (XLU reduces)
    zeros = (jnp.max(x, axis=-1, keepdims=True)
             == jnp.min(x, axis=-1, keepdims=True))                  # (rows, 1)
    a = jnp.where(zeros, -100000.0, a)

    # softmax over patches within each batch (small (bn, p, h) view only)
    a3 = a.reshape(bn, p, h)
    m = jnp.max(a3, axis=1, keepdims=True)
    e = jnp.exp(a3 - m)
    denom = jnp.sum(e, axis=1, keepdims=True)
    w = (e * pl.reciprocal(denom, approx=False)).reshape(rows, h)    # (rows, h)

    # Expand per-head weight across that head's d feature lanes: (rows,h)@(h,D)
    w_exp = jnp.dot(w.astype(exp_ref.dtype), exp_ref[...],
                    preferred_element_type=jnp.float32)              # (rows, D)

    # enc_cls[b,:] = sum_p x[b,p,:] * w_exp[b,p,:]; the per-batch sum over p is
    # one MXU matmul with the constant 0/1 pooling matrix S (bn, rows) — no
    # (bn, p, D) relayout of the wide tensors.
    y = x * w_exp                                                    # f32 (promoted)
    cls = jnp.dot(s_ref[...], y.astype(s_ref.dtype),
                  preferred_element_type=jnp.float32)                # (bn, D)
    cls_ref[...] = cls.astype(cls_ref.dtype)


def _vmem_capacity_bytes():
    """Best-effort VMEM capacity query with conservative fallback."""
    try:
        info = pltpu.get_tpu_info()
        cap = int(getattr(info, "vmem_capacity_bytes", 0) or 0)
        if cap > 0:
            return cap
    except Exception:
        pass
    try:
        kind = jax.devices()[0].device_kind.lower()
    except Exception:
        kind = ""
    if "v5" in kind or "v6" in kind:
        return 128 * 1024 * 1024
    return 64 * 1024 * 1024          # conservative (v7x per-TC VMEM)


def _choose_block_n(n, p, D, vmem_capacity):
    """Batches per grid step + VMEM limit request, sized per TPU generation."""
    lane_padded = ((D + 127) // 128) * 128
    row_bytes = lane_padded * 4                      # lane-padded f32 working row

    if vmem_capacity >= 100 * (1 << 20):             # v5e / v6e: 128 MiB physical
        budget = 96 * (1 << 20)
        target_rows = 2048
    else:                                            # v7x: 64 MiB per TensorCore
        budget = 40 * (1 << 20)
        target_rows = 1024
    budget = min(budget, max(vmem_capacity - 16 * (1 << 20), 16 * (1 << 20)))

    bn = max(1, -(-target_rows // p))
    bn = min(bn, 256)                                # bounds the (bn, bn*p) pooling matrix
    bn = ((bn + 7) // 8) * 8                         # sublane-aligned blocks

    def vmem_need(bn_):
        rows = bn_ * p
        tile = rows * row_bytes
        consts = (D * lane_padded + D * 128 + 8 * lane_padded + bn_ * rows) * 4
        # ~6 live tile-sized f32 buffers (2x double-buffered x, k, w_exp,
        # x*w_exp temp) + double-buffered (bn, D) output + resident constants.
        return 6 * tile + 2 * bn_ * row_bytes + consts

    while bn > 8 and vmem_need(bn) > budget:
        bn = ((bn // 2 + 7) // 8) * 8

    if n >= 16:
        # >= 2 grid blocks so the "parallel" batch axis can use both v7x cores.
        bn = min(bn, ((-(-n // 2) + 7) // 8) * 8)
    elif bn >= n:
        bn = n                                       # single full-extent block (layout-legal)
    return bn, budget


def agg_mhattn_forward(x, w_k, Q, h, block_n=None, use_bf16=False):
    """x: (n, p, D); w_k: (D, D) nn.Linear weight (y = x @ W^T); Q: (h, D//h)."""
    n, p, D = x.shape
    d = D // h
    out_dtype = x.dtype
    compute_dtype = jnp.bfloat16 if use_bf16 else x.dtype

    vmem_cap = _vmem_capacity_bytes()
    auto_bn, vmem_budget = _choose_block_n(n, p, D, vmem_cap)
    if block_n is None:
        block_n = auto_bn

    num_blocks = pl.cdiv(n, block_n)
    block_rows = block_n * p
    total_rows = n * p
    mask_tail = (n % block_n) != 0

    # 2-D view of x (free metadata reshape in the wrapper — no HBM pad copy,
    # no per-batch (p, D)->(8,128) padding of a 3-D BlockSpec).
    x2d = x.reshape(total_rows, D).astype(compute_dtype)

    # Constant operands, built once in the wrapper and kept resident in VMEM.
    wkt = w_k.T.astype(compute_dtype)                              # y = x @ W^T
    lane = jnp.arange(D)
    head = lane // d
    # Block-diagonal Q: (D, h), qbd[h*d + j, h] = Q[h, j]
    qbd = jnp.zeros((D, h), compute_dtype).at[lane, head].set(
        Q.reshape(-1).astype(compute_dtype))
    # Head-expansion matrix: (h, D), expand[h, h*d + j] = 1
    expand = jnp.zeros((h, D), compute_dtype).at[head, lane].set(1.0)
    # Per-batch "sum over p" pooling matrix: S[b, b*p + q] = 1
    smat = (jnp.arange(block_rows)[None, :] // p
            == jnp.arange(block_n)[:, None]).astype(compute_dtype)

    itemsize = jnp.dtype(compute_dtype).itemsize
    cost = pl.CostEstimate(
        flops=int(total_rows * (2 * D * D + 4 * D * h + 8 * D)
                  + num_blocks * block_n * block_rows * D * 2),
        transcendentals=int(total_rows * h),
        bytes_accessed=int(
            total_rows * D * itemsize
            + (wkt.size + qbd.size + expand.size + smat.size) * itemsize
            + n * D * jnp.dtype(out_dtype).itemsize),
    )

    kernel = functools.partial(_agg_mhattn_kernel,
                               total_rows=total_rows, mask_tail=mask_tail)

    cls = pl.pallas_call(
        kernel,
        out_shape=jax.ShapeDtypeStruct((n, D), out_dtype),
        grid=(num_blocks,),
        in_specs=[
            # block_n batches per step as a 2-D (block_n*p, D) slab.
            pl.BlockSpec((block_rows, D), lambda i: (i, 0)),
            # Constant weights: untiled, resident in VMEM (no per-step DMA).
            pl.BlockSpec(memory_space=pltpu.MemorySpace.VMEM),
            pl.BlockSpec(memory_space=pltpu.MemorySpace.VMEM),
            pl.BlockSpec(memory_space=pltpu.MemorySpace.VMEM),
            pl.BlockSpec(memory_space=pltpu.MemorySpace.VMEM),
        ],
        out_specs=pl.BlockSpec((block_n, D), lambda i: (i, 0)),
        compiler_params=pltpu.CompilerParams(
            dimension_semantics=("parallel",),       # batch blocks across TCs
            vmem_limit_bytes=int(vmem_budget),
        ),
        cost_estimate=cost,
    )(x2d, wkt, qbd, expand, smat)

    enc_seq = x.reshape(total_rows, D)
    return {"enc_cls": cls, "enc_seq": enc_seq, "org_seq": enc_seq}


def agg_mhattn_reference(x, w_k, Q, h):
    """Pure-JAX reference mirroring the PyTorch forward (eval mode)."""
    n, p, D = x.shape
    d = D // h
    k = jax.nn.relu(jnp.einsum("npd,ed->npe", x, w_k)).reshape(n, p, h, d)
    v = x.reshape(n, p, h, d)
    A = jnp.einsum("nphd,hd->nph", k, Q)
    zeros = jnp.std(x, axis=-1, ddof=1) == 0
    A = jnp.where(zeros[..., None], -100000.0, A)
    w = jax.nn.softmax(A, axis=1)
    enc_cls = jnp.einsum("nphd,nph->nhd", v, w).reshape(n, -1)
    return enc_cls


if __name__ == "__main__":
    # Small shapes consistent with the module: in_dim = 32, h = 8 => d = 4.
    n, p, in_dim, h = 2, 8, 32, 8
    d = in_dim // h

    key = jax.random.PRNGKey(0)
    kx, kw, kq = jax.random.split(key, 3)

    x = jax.random.normal(kx, (n, p, in_dim), dtype=jnp.float32)
    # Make one patch row constant to exercise the zero-std masking path.
    x = x.at[0, 3, :].set(0.5)

    # Deterministic parameter init (shapes per __init__):
    #   proj_k Linear weight: (in_dim, in_dim), no bias
    #   Q: (h, d) ~ U(-1/sqrt(d), 1/sqrt(d))
    bound_w = 1.0 / math.sqrt(in_dim)
    w_k = jax.random.uniform(kw, (in_dim, in_dim), jnp.float32, -bound_w, bound_w)
    stdv_Q = 1.0 / math.sqrt(d)
    Q = jax.random.uniform(kq, (h, d), jnp.float32, -stdv_Q, stdv_Q)

    ref_cls = agg_mhattn_reference(x, w_k, Q, h)

    # Default f32 path: must match the reference at 1e-5.
    out = agg_mhattn_forward(x, w_k, Q, h)
    jax.block_until_ready(out)
    assert out["enc_cls"].shape == (n, in_dim)
    assert out["enc_seq"].shape == (n * p, in_dim)
    assert jnp.allclose(out["enc_cls"], ref_cls, atol=1e-5, rtol=1e-5), (
        "Pallas enc_cls mismatch vs reference (f32 path)")
    assert jnp.allclose(out["enc_seq"], x.reshape(n * p, in_dim))

    # Optional bf16-MXU path (halved input DMA, bf16 matmuls w/ f32 accum);
    # checked at a looser tolerance appropriate for bf16 operands.
    out_bf16 = agg_mhattn_forward(x, w_k, Q, h, use_bf16=True)
    jax.block_until_ready(out_bf16)
    assert out_bf16["enc_cls"].shape == (n, in_dim)
    assert jnp.allclose(out_bf16["enc_cls"], ref_cls, atol=5e-2, rtol=5e-2), (
        "Pallas enc_cls mismatch vs reference (bf16 path)")

    print("KERNEL_OK")
</pallas_src>

<mosaic_0001>
module attributes {stable_mosaic.version = 11 : i64} {
  func.func @_agg_mhattn_kernel(%arg0: i32, %arg1: memref<16x32xf32, #tpu.memory_space<vmem>>, %arg2: memref<32x32xf32, #tpu.memory_space<vmem>>, %arg3: memref<32x8xf32, #tpu.memory_space<vmem>>, %arg4: memref<8x32xf32, #tpu.memory_space<vmem>>, %arg5: memref<2x16xf32, #tpu.memory_space<vmem>>, %arg6: memref<2x32xf32, #tpu.memory_space<vmem>>) attributes {dimension_semantics = [#tpu.dimension_semantics<parallel>], iteration_bounds = array<i64: 1>, scalar_prefetch = 0 : i64, scratch_operands = 0 : i64, tpu.core_type = #tpu.core_type<tc>, window_params = [{transform_indices = @transform_0, window_bounds = array<i64: 16, 32>}, {pipeline_mode = #tpu.pipeline_mode<synchronous>, transform_indices = @transform_1, window_bounds = array<i64: 32, 32>}, {pipeline_mode = #tpu.pipeline_mode<synchronous>, transform_indices = @transform_2, window_bounds = array<i64: 32, 8>}, {pipeline_mode = #tpu.pipeline_mode<synchronous>, transform_indices = @transform_3, window_bounds = array<i64: 8, 32>}, {pipeline_mode = #tpu.pipeline_mode<synchronous>, transform_indices = @transform_4, window_bounds = array<i64: 2, 16>}, {transform_indices = @transform_5, window_bounds = array<i64: 2, 32>}]} {
    %c0 = arith.constant 0 : index
    %c0_0 = arith.constant 0 : index
    %0 = vector.load %arg1[%c0, %c0_0] : memref<16x32xf32, #tpu.memory_space<vmem>>, vector<16x32xf32>
    %c0_1 = arith.constant 0 : index
    %c0_2 = arith.constant 0 : index
    %1 = vector.load %arg2[%c0_1, %c0_2] : memref<32x32xf32, #tpu.memory_space<vmem>>, vector<32x32xf32>
    %cst = arith.constant dense<0.000000e+00> : vector<16x32xf32>
    %2 = tpu.matmul %0, %1, %cst {dimension_numbers = #tpu.dot_dimension_numbers<[1], [0], [0], [1], [0, 0, 1, 1], [], []>} : vector<16x32xf32>, vector<32x32xf32>, vector<16x32xf32> -> vector<16x32xf32>
    %cst_3 = arith.constant 0.000000e+00 : f32
    %3 = vector.broadcast %cst_3 : f32 to vector<16x32xf32>
    %4 = arith.maximumf %2, %3 : vector<16x32xf32>
    %c0_4 = arith.constant 0 : index
    %c0_5 = arith.constant 0 : index
    %5 = vector.load %arg3[%c0_4, %c0_5] : memref<32x8xf32, #tpu.memory_space<vmem>>, vector<32x8xf32>
    %cst_6 = arith.constant dense<0.000000e+00> : vector<16x8xf32>
    %6 = tpu.matmul %4, %5, %cst_6 {dimension_numbers = #tpu.dot_dimension_numbers<[1], [0], [0], [1], [0, 0, 1, 1], [], []>} : vector<16x32xf32>, vector<32x8xf32>, vector<16x8xf32> -> vector<16x8xf32>
    %cst_7 = arith.constant dense<0xFF800000> : vector<16xf32>
    %7 = vector.multi_reduction <maximumf>, %0, %cst_7 [1] : vector<16x32xf32> to vector<16xf32>
    %8 = vector.shape_cast %7 : vector<16xf32> to vector<16x1xf32>
    %cst_8 = arith.constant dense<0x7F800000> : vector<16xf32>
    %9 = vector.multi_reduction <minimumf>, %0, %cst_8 [1] : vector<16x32xf32> to vector<16xf32>
    %10 = vector.shape_cast %9 : vector<16xf32> to vector<16x1xf32>
    %11 = arith.cmpf oeq, %8, %10 : vector<16x1xf32>
    %cst_9 = arith.constant -1.000000e+05 : f32
    %12 = vector.shape_cast %11 : vector<16x1xi1> to vector<16x1xi1>
    %13 = vector.broadcast %12 : vector<16x1xi1> to vector<16x8xi1>
    %14 = vector.broadcast %cst_9 : f32 to vector<16x8xf32>
    %15 = arith.select %13, %14, %6 : vector<16x8xi1>, vector<16x8xf32>
    %16 = vector.shape_cast %15 : vector<16x8xf32> to vector<2x8x8xf32>
    %cst_10 = arith.constant dense<0xFF800000> : vector<2x8xf32>
    %17 = vector.multi_reduction <maximumf>, %16, %cst_10 [1] : vector<2x8x8xf32> to vector<2x8xf32>
    %18 = vector.shape_cast %17 : vector<2x8xf32> to vector<2x1x8xf32>
    %19 = vector.broadcast %18 : vector<2x1x8xf32> to vector<2x8x8xf32>
    %20 = arith.subf %16, %19 : vector<2x8x8xf32>
    %21 = math.exp %20 : vector<2x8x8xf32>
    %cst_11 = arith.constant dense<0.000000e+00> : vector<2x8xf32>
    %22 = vector.multi_reduction <add>, %21, %cst_11 [1] : vector<2x8x8xf32> to vector<2x8xf32>
    %23 = vector.shape_cast %22 : vector<2x8xf32> to vector<2x1x8xf32>
    %24 = tpu.reciprocal %23 : vector<2x1x8xf32> -> vector<2x1x8xf32>
    %25 = vector.broadcast %24 : vector<2x1x8xf32> to vector<2x8x8xf32>
    %26 = arith.mulf %21, %25 : vector<2x8x8xf32>
    %27 = vector.shape_cast %26 : vector<2x8x8xf32> to vector<16x8xf32>
    %c0_12 = arith.constant 0 : index
    %c0_13 = arith.constant 0 : index
    %28 = vector.load %arg4[%c0_12, %c0_13] : memref<8x32xf32, #tpu.memory_space<vmem>>, vector<8x32xf32>
    %cst_14 = arith.constant dense<0.000000e+00> : vector<16x32xf32>
    %29 = tpu.matmul %27, %28, %cst_14 {dimension_numbers = #tpu.dot_dimension_numbers<[1], [0], [0], [1], [0, 0, 1, 1], [], []>} : vector<16x8xf32>, vector<8x32xf32>, vector<16x32xf32> -> vector<16x32xf32>
    %30 = arith.mulf %0, %29 : vector<16x32xf32>
    %c0_15 = arith.constant 0 : index
    %c0_16 = arith.constant 0 : index
    %31 = vector.load %arg5[%c0_15, %c0_16] : memref<2x16xf32, #tpu.memory_space<vmem>>, vector<2x16xf32>
    %cst_17 = arith.constant dense<0.000000e+00> : vector<2x32xf32>
    %32 = tpu.matmul %31, %30, %cst_17 {dimension_numbers = #tpu.dot_dimension_numbers<[1], [0], [0], [1], [0, 0, 1, 1], [], []>} : vector<2x16xf32>, vector<16x32xf32>, vector<2x32xf32> -> vector<2x32xf32>
    %c0_18 = arith.constant 0 : index
    %c0_19 = arith.constant 0 : index
    %33 = vector.load %arg6[%c0_18, %c0_19] : memref<2x32xf32, #tpu.memory_space<vmem>>, vector<2x32xf32>
    tpu.vector_store %arg6[%c0_18, %c0_19], %32 {strides = array<i32>} : memref<2x32xf32, #tpu.memory_space<vmem>>, vector<2x32xf32>,
    return
  }
  func.func @transform_0(%arg0: i32) -> (i32, i32) {
    %c0_i32 = arith.constant 0 : i32
    %c0_i32_0 = arith.constant 0 : i32
    return %arg0, %c0_i32 : i32, i32
  }
  func.func @transform_1(%arg0: i32) -> (i32, i32) {
    %c0_i32 = arith.constant 0 : i32
    %c0_i32_0 = arith.constant 0 : i32
    %c0_i32_1 = arith.constant 0 : i32
    return %c0_i32, %c0_i32_0 : i32, i32
  }
  func.func @transform_2(%arg0: i32) -> (i32, i32) {
    %c0_i32 = arith.constant 0 : i32
    %c0_i32_0 = arith.constant 0 : i32
    %c0_i32_1 = arith.constant 0 : i32
    return %c0_i32, %c0_i32_0 : i32, i32
  }
  func.func @transform_3(%arg0: i32) -> (i32, i32) {
    %c0_i32 = arith.constant 0 : i32
    %c0_i32_0 = arith.constant 0 : i32
    %c0_i32_1 = arith.constant 0 : i32
    return %c0_i32, %c0_i32_0 : i32, i32
  }
  func.func @transform_4(%arg0: i32) -> (i32, i32) {
    %c0_i32 = arith.constant 0 : i32
    %c0_i32_0 = arith.constant 0 : i32
    %c0_i32_1 = arith.constant 0 : i32
    return %c0_i32, %c0_i32_0 : i32, i32
  }
  func.func @transform_5(%arg0: i32) -> (i32, i32) {
    %c0_i32 = arith.constant 0 : i32
    %c0_i32_0 = arith.constant 0 : i32
    return %arg0, %c0_i32 : i32, i32
  }
}

</mosaic_0001>

<llo_original>
// kernel: tpu_custom_call.1
$region0: #{tpu_custom_call.1}
  #allocation0 [shape = 'u32[]', space=smem, size = 0x4, offset = 0x4, fixed_abs, tag = 'smem constant byte address 0x4 - core index']
  #allocation1 [shape = 'u32[144,128]{1,0:T(1,128)}', space=vmem, size = 0x12000, scoped, tag = 'internal scratch']
  %s0 = inlined_call_operand.hbm [shape: f32[16,32], index: 0, kind: input, shape index: {}]
  %s1 = inlined_call_operand.vmem [shape: f32[32,32], index: 1, kind: input, shape index: {}]
  %s2 = inlined_call_operand.vmem [shape: f32[32,8], index: 2, kind: input, shape index: {}]
  %s3 = inlined_call_operand.vmem [shape: f32[8,32], index: 3, kind: input, shape index: {}]
  %s4 = inlined_call_operand.vmem [shape: f32[2,16], index: 4, kind: input, shape index: {}]
  %s5 = inlined_call_operand.hbm [shape: f32[2,32], index: 5, kind: output, shape index: {}]
  %s6 = sld [smem:[#allocation0]]
  $region34: #{tpu_custom_call.1} parent=0
    _
  %s8 = ssub.s32 1, %s6
  %s9 = scalar_select 0, %s8, %s6
  $region1: #{tpu_custom_call.1} parent=0
    #allocation2 [shape = 'u8[8192]{0}', space=vmem, size = 0x2000, scoped, tag = 'input window, operand 0, single buffered']
    #allocation3 [shape = 's32[1]{0}', space=sflag, size = 0x4, scoped, tag = 'scoped memory for tpu_custom_call.1']
    #allocation4 [shape = 's32[1]{0}', space=sflag, size = 0x4, scoped, tag = 'scoped memory for tpu_custom_call.1']
    #allocation5 [shape = 'u8[1024]{0}', space=vmem, size = 0x400, scoped, tag = 'output window, operand 0, single buffered']
    %10 = vsyncpa [#allocation3], 0
    %11 = vsyncpa [#allocation4], 0
    // Predicated region
    $region2: #{tpu_custom_call.1} parent=1 // pred_check
      _
    $region3: #{tpu_custom_call.1} parent=1 // pred_check_branch
      %13 = sbr.rel (0) target = $region5
    $region4: #{tpu_custom_call.1} parent=1 // pred_region
      %s15 = ssub.s32 256, 256
      %16 = vsyncadd [#allocation3], %s15
      %s17 = sshll.u32 [#allocation2], 4
      %s18 = int_to_ptr.vmem [resolvable:$true] %s17
      %23 = dma.hbm_to_vmem [thread:$0]  %s0, 256, %s18, [#allocation3], 128, 128, 8
    $region5: #{tpu_custom_call.1} parent=1 // pred_fallthru
      _
    // Predicated region
    $region6: #{tpu_custom_call.1} parent=1 // pred_check
      _
    $region7: #{tpu_custom_call.1} parent=1 // pred_check_branch
      %25 = sbr.rel (0) target = $region9
    $region8: #{tpu_custom_call.1} parent=1 // pred_region
      _
    $region9: #{tpu_custom_call.1} parent=1 // pred_fallthru
      _
    // Predicated region
    $region10: #{tpu_custom_call.1} parent=1 // pred_check
      _
    $region11: #{tpu_custom_call.1} parent=1 // pred_check_branch
      %27 = sbr.rel (0) target = $region13
    $region12: #{tpu_custom_call.1} parent=1 // pred_region
      _
    $region13: #{tpu_custom_call.1} parent=1 // pred_fallthru
      _
    // Predicated region
    $region14: #{tpu_custom_call.1} parent=1 // pred_check
      _
    $region15: #{tpu_custom_call.1} parent=1 // pred_check_branch
      %29 = sbr.rel (0) target = $region17
    $region16: #{tpu_custom_call.1} parent=1 // pred_region
      _
    $region17: #{tpu_custom_call.1} parent=1 // pred_fallthru
      _
    // Predicated region
    $region18: #{tpu_custom_call.1} parent=1 // pred_check
      _
    $region19: #{tpu_custom_call.1} parent=1 // pred_check_branch
      %31 = sbr.rel (0) target = $region21
    $region20: #{tpu_custom_call.1} parent=1 // pred_region
      _
    $region21: #{tpu_custom_call.1} parent=1 // pred_fallthru
      _
    // Predicated region
    $region22: #{tpu_custom_call.1} parent=1 // pred_check
      _
    $region23: #{tpu_custom_call.1} parent=1 // pred_check_branch
      %33 = sbr.rel (0) target = $region25
    $region24: #{tpu_custom_call.1} parent=1 // pred_region
      %34 = dma.done [#allocation3], 256
    $region25: #{tpu_custom_call.1} parent=1 // pred_fallthru
      _
    %v35 = vld [vmem:[#allocation2] sm:$0xff]
    %v36 = vld [vmem:[#allocation2 + $0x8] sm:$0xff]
    %v37 = vld [vmem:[%s1] sm:$0xff]
    %v38 = vld [vmem:[%s1 + $0x8] sm:$0xff]
    %v39 = vld [vmem:[%s1 + $0x10] sm:$0xff]
    %v40 = vld [vmem:[%s1 + $0x18] sm:$0xff]
    %vm41 = vcmask 261120
    %v43 = vsel %vm41, %v35, 0
    %v46 = vsel %vm41, %v36, 0
    %48 = vmatprep.subr.mxu0 0.0
    %49 = vmatpush1.msra.mxu0 %v37
    %50 = vmatprep.subr.mxu0 0.0
    %51 = vmatpush1.msra.mxu0 %v38
    %52 = vmatprep.subr.mxu0 0.0
    %53 = vmatpush1.msra.mxu0 %v39
    %54 = vmatprep.subr.mxu0 0.0
    %55 = vmatpush1.msra.mxu0 %v40
    %56 = vmatprep.subr.mxu0 0.0
    %57 = vmatpush1.msra.mxu0 0.0
    %58 = vmatprep.subr.mxu0 0.0
    %59 = vmatpush1.msra.mxu0 0.0
    %60 = vmatprep.subr.mxu0 0.0
    %61 = vmatpush1.msra.mxu0 0.0
    %62 = vmatprep.subr.mxu0 0.0
    %63 = vmatpush1.msra.mxu0 0.0
    %64 = vmatprep.subr.mxu0 0.0
    %65 = vmatpush1.msra.mxu0 0.0
    %66 = vmatprep.subr.mxu0 0.0
    %67 = vmatpush1.msra.mxu0 0.0
    %68 = vmatprep.subr.mxu0 0.0
    %69 = vmatpush1.msra.mxu0 0.0
    %70 = vmatprep.subr.mxu0 0.0
    %71 = vmatpush1.msra.mxu0 0.0
    %72 = vmatprep.subr.mxu0 0.0
    %73 = vmatpush1.msra.mxu0 0.0
    %74 = vmatprep.subr.mxu0 0.0
    %75 = vmatpush1.msra.mxu0 0.0
    %76 = vmatprep.subr.mxu0 0.0
    %77 = vmatpush1.msra.mxu0 0.0
    %78 = vmatprep.subr.mxu0 0.0
    %79 = vmatpush1.msra.mxu0 0.0
    %80 = vmatprep.subr.mxu0 0.0
    %81 = vmatpush1.msra.mxu0 0.0
    %82 = vmatprep.subr.mxu0 0.0
    %83 = vmatpush1.msra.mxu0 0.0
    %84 = vmatprep.subr.mxu0 0.0
    %85 = vmatpush1.msra.mxu0 0.0
    %86 = vmatprep.subr.mxu0 0.0
    %87 = vmatpush1.msra.mxu0 0.0
    %88 = vmatprep.subr.mxu0 0.0
    %89 = vmatpush1.msra.mxu0 0.0
    %90 = vmatprep.subr.mxu0 0.0
    %91 = vmatpush1.msra.mxu0 0.0
    %92 = vmatprep.subr.mxu0 0.0
    %93 = vmatpush1.msra.mxu0 0.0
    %94 = vmatprep.subr.mxu0 0.0
    %95 = vmatpush1.msra.mxu0 0.0
    %96 = vmatprep.subr.mxu0 0.0
    %97 = vmatpush1.msra.mxu0 0.0
    %98 = vmatprep.subr.mxu0 0.0
    %99 = vmatpush1.msra.mxu0 0.0
    %100 = vmatprep.subr.mxu0 0.0
    %101 = vmatpush1.msra.mxu0 0.0
    %102 = vmatprep.subr.mxu0 0.0
    %103 = vmatpush1.msra.mxu0 0.0
    %104 = vmatprep.subr.mxu0 0.0
    %105 = vmatpush1.msra.mxu0 0.0
    %106 = vmatprep.subr.mxu0 0.0
    %107 = vmatpush1.msra.mxu0 0.0
    %108 = vmatprep.subr.mxu0 0.0
    %109 = vmatpush1.msra.mxu0 0.0
    %110 = vmatprep.subr.mxu0 0.0
    %111 = vmatpush1.msra.mxu0 0.0
    %112 = vmatprep.mubr.f32.mxu0 0.0
    %113 = vmatmul.mubr.f32.gmra.mrb[0].mxu0 %v43
    %v114 = vpop.f32.mrb[0].mxu0
    %v115 = vadd.f32 0.0, %v114
    %v116 = vpop.f32.mrb[0].mxu0
    %117 = vmatprep.mubr.f32.mxu0 0.0
    %118 = vmatmul.mubr.f32.gmra.mrb[0].mxu0 %v46
    %v119 = vpop.f32.mrb[0].mxu0
    %v120 = vadd.f32 0.0, %v119
    %v121 = vpop.f32.mrb[0].mxu0
    %122 = vdwg.mxu0
    %v123 = vmax.f32 %v115, 0.0
    %v124 = vmax.f32 %v120, 0.0
    %v125 = vld [vmem:[%s2] sm:$0xff]
    %v126 = vld [vmem:[%s2 + $0x8] sm:$0xff]
    %v127 = vld [vmem:[%s2 + $0x10] sm:$0xff]
    %v128 = vld [vmem:[%s2 + $0x18] sm:$0xff]
    %v130 = vsel %vm41, %v123, 0
    %v133 = vsel %vm41, %v124, 0
    %135 = vmatprep.subr.mxu0 0.0
    %136 = vmatpush1.msra.mxu0 %v125
    %137 = vmatprep.subr.mxu0 0.0
    %138 = vmatpush1.msra.mxu0 %v126
    %139 = vmatprep.subr.mxu0 0.0
    %140 = vmatpush1.msra.mxu0 %v127
    %141 = vmatprep.subr.mxu0 0.0
    %142 = vmatpush1.msra.mxu0 %v128
    %143 = vmatprep.subr.mxu0 0.0
    %144 = vmatpush1.msra.mxu0 0.0
    %145 = vmatprep.subr.mxu0 0.0
    %146 = vmatpush1.msra.mxu0 0.0
    %147 = vmatprep.subr.mxu0 0.0
    %148 = vmatpush1.msra.mxu0 0.0
    %149 = vmatprep.subr.mxu0 0.0
    %150 = vmatpush1.msra.mxu0 0.0
    %151 = vmatprep.subr.mxu0 0.0
    %152 = vmatpush1.msra.mxu0 0.0
    %153 = vmatprep.subr.mxu0 0.0
    %154 = vmatpush1.msra.mxu0 0.0
    %155 = vmatprep.subr.mxu0 0.0
    %156 = vmatpush1.msra.mxu0 0.0
    %157 = vmatprep.subr.mxu0 0.0
    %158 = vmatpush1.msra.mxu0 0.0
    %159 = vmatprep.subr.mxu0 0.0
    %160 = vmatpush1.msra.mxu0 0.0
    %161 = vmatprep.subr.mxu0 0.0
    %162 = vmatpush1.msra.mxu0 0.0
    %163 = vmatprep.subr.mxu0 0.0
    %164 = vmatpush1.msra.mxu0 0.0
    %165 = vmatprep.subr.mxu0 0.0
    %166 = vmatpush1.msra.mxu0 0.0
    %167 = vmatprep.subr.mxu0 0.0
    %168 = vmatpush1.msra.mxu0 0.0
    %169 = vmatprep.subr.mxu0 0.0
    %170 = vmatpush1.msra.mxu0 0.0
    %171 = vmatprep.subr.mxu0 0.0
    %172 = vmatpush1.msra.mxu0 0.0
    %173 = vmatprep.subr.mxu0 0.0
    %174 = vmatpush1.msra.mxu0 0.0
    %175 = vmatprep.subr.mxu0 0.0
    %176 = vmatpush1.msra.mxu0 0.0
    %177 = vmatprep.subr.mxu0 0.0
    %178 = vmatpush1.msra.mxu0 0.0
    %179 = vmatprep.subr.mxu0 0.0
    %180 = vmatpush1.msra.mxu0 0.0
    %181 = vmatprep.subr.mxu0 0.0
    %182 = vmatpush1.msra.mxu0 0.0
    %183 = vmatprep.subr.mxu0 0.0
    %184 = vmatpush1.msra.mxu0 0.0
    %185 = vmatprep.subr.mxu0 0.0
    %186 = vmatpush1.msra.mxu0 0.0
    %187 = vmatprep.subr.mxu0 0.0
    %188 = vmatpush1.msra.mxu0 0.0
    %189 = vmatprep.subr.mxu0 0.0
    %190 = vmatpush1.msra.mxu0 0.0
    %191 = vmatprep.subr.mxu0 0.0
    %192 = vmatpush1.msra.mxu0 0.0
    %193 = vmatprep.subr.mxu0 0.0
    %194 = vmatpush1.msra.mxu0 0.0
    %195 = vmatprep.subr.mxu0 0.0
    %196 = vmatpush1.msra.mxu0 0.0
    %197 = vmatprep.subr.mxu0 0.0
    %198 = vmatpush1.msra.mxu0 0.0
    %199 = vmatprep.mubr.f32.mxu0 0.0
    %200 = vmatmul.mubr.f32.gmra.mrb[0].mxu0 %v130
    %v201 = vpop.f32.mrb[0].mxu0
    %v202 = vadd.f32 0.0, %v201
    %v203 = vpop.f32.mrb[0].mxu0
    %204 = vmatprep.mubr.f32.mxu0 0.0
    %205 = vmatmul.mubr.f32.gmra.mrb[0].mxu0 %v133
    %v206 = vpop.f32.mrb[0].mxu0
    %v207 = vadd.f32 0.0, %v206
    %v208 = vpop.f32.mrb[0].mxu0
    %209 = vdwg.mxu0
    %v210 = vsel %vm41, %v35, -inf
    %211 = vmax.xlane.f32.xlu0 %v210
    %v212 = vpop.xlane.xlu0 %211
    %v213 = vsel %vm41, %v36, -inf
    %214 = vmax.xlane.f32.xlu0 %v213
    %v215 = vpop.xlane.xlu0 %214
    %v216 = vsel %vm41, %v35, inf
    %217 = vmin.xlane.f32.xlu0 %v216
    %v218 = vpop.xlane.xlu0 %217
    %v219 = vsel %vm41, %v36, inf
    %220 = vmin.xlane.f32.xlu0 %v219
    %v221 = vpop.xlane.xlu0 %220
    %vm222 = vcmp.eq.f32.partialorder %v212, %v218
    %vm223 = vcmp.eq.f32.partialorder %v215, %v221
    %v224 = vsel %vm222, 1, 0
    %v225 = vsel %vm223, 1, 0
    %vm226 = vcmp.eq.s32.totalorder %v224, 1
    %vm227 = vcmp.eq.s32.totalorder %v225, 1
    %v228 = vsel %vm226, -100000.0, %v202
    %v229 = vsel %vm227, -100000.0, %v207
    %vm230 = vcmask 64512
    %v231 = vsel %vm230, %v228, -inf
    %v232 = vrot.slane %v231, 4
    %v233 = vmax.f32 %v231, %v232
    %v234 = vrot.slane %v233, 2
    %v235 = vmax.f32 %v233, %v234
    %v236 = vrot.slane %v235, 1
    %v237 = vmax.f32 %v235, %v236
    %v238 = vsel %vm230, %v229, -inf
    %v239 = vrot.slane %v238, 4
    %v240 = vmax.f32 %v238, %v239
    %v241 = vrot.slane %v240, 2
    %v242 = vmax.f32 %v240, %v241
    %v243 = vrot.slane %v242, 1
    %v244 = vmax.f32 %v242, %v243
    %v245 = vsub.f32 %v228, %v237
    %v246 = vsub.f32 %v229, %v244
    %v247 = vmul.f32 %v245, 1.442695
    %v248 = vpow.pop %v247
    %v249 = vmul.f32 %v246, 1.442695
    %v250 = vpow.pop %v249
    %v251 = vsel %vm230, %v248, 0.0
    %v252 = vrot.slane %v251, 4
    %v253 = vadd.f32 %v251, %v252
    %v254 = vrot.slane %v253, 2
    %v255 = vadd.f32 %v253, %v254
    %v256 = vrot.slane %v255, 1
    %v257 = vadd.f32 %v255, %v256
    %v258 = vsel %vm230, %v250, 0.0
    %v259 = vrot.slane %v258, 4
    %v260 = vadd.f32 %v258, %v259
    %v261 = vrot.slane %v260, 2
    %v262 = vadd.f32 %v260, %v261
    %v263 = vrot.slane %v262, 1
    %v264 = vadd.f32 %v262, %v263
    %v265 = vrcp.pop %v257
    %v266 = vrcp.pop %v264
    %v267 = vmul.f32 %v248, %v265
    %v268 = vmul.f32 %v250, %v266
    %v269 = vld [vmem:[%s3] sm:$0xff]
    %v271 = vsel %vm230, %v267, 0
    %v274 = vsel %vm230, %v268, 0
    %276 = vmatprep.subr.mxu0 0.0
    %277 = vmatpush1.msra.mxu0 %v269
    %278 = vmatprep.subr.mxu0 0.0
    %279 = vmatpush1.msra.mxu0 0.0
    %280 = vmatprep.subr.mxu0 0.0
    %281 = vmatpush1.msra.mxu0 0.0
    %282 = vmatprep.subr.mxu0 0.0
    %283 = vmatpush1.msra.mxu0 0.0
    %284 = vmatprep.subr.mxu0 0.0
    %285 = vmatpush1.msra.mxu0 0.0
    %286 = vmatprep.subr.mxu0 0.0
    %287 = vmatpush1.msra.mxu0 0.0
    %288 = vmatprep.subr.mxu0 0.0
    %289 = vmatpush1.msra.mxu0 0.0
    %290 = vmatprep.subr.mxu0 0.0
    %291 = vmatpush1.msra.mxu0 0.0
    %292 = vmatprep.subr.mxu0 0.0
    %293 = vmatpush1.msra.mxu0 0.0
    %294 = vmatprep.subr.mxu0 0.0
    %295 = vmatpush1.msra.mxu0 0.0
    %296 = vmatprep.subr.mxu0 0.0
    %297 = vmatpush1.msra.mxu0 0.0
    %298 = vmatprep.subr.mxu0 0.0
    %299 = vmatpush1.msra.mxu0 0.0
    %300 = vmatprep.subr.mxu0 0.0
    %301 = vmatpush1.msra.mxu0 0.0
    %302 = vmatprep.subr.mxu0 0.0
    %303 = vmatpush1.msra.mxu0 0.0
    %304 = vmatprep.subr.mxu0 0.0
    %305 = vmatpush1.msra.mxu0 0.0
    %306 = vmatprep.subr.mxu0 0.0
    %307 = vmatpush1.msra.mxu0 0.0
    %308 = vmatprep.subr.mxu0 0.0
    %309 = vmatpush1.msra.mxu0 0.0
    %310 = vmatprep.subr.mxu0 0.0
    %311 = vmatpush1.msra.mxu0 0.0
    %312 = vmatprep.subr.mxu0 0.0
    %313 = vmatpush1.msra.mxu0 0.0
    %314 = vmatprep.subr.mxu0 0.0
    %315 = vmatpush1.msra.mxu0 0.0
    %316 = vmatprep.subr.mxu0 0.0
    %317 = vmatpush1.msra.mxu0 0.0
    %318 = vmatprep.subr.mxu0 0.0
    %319 = vmatpush1.msra.mxu0 0.0
    %320 = vmatprep.subr.mxu0 0.0
    %321 = vmatpush1.msra.mxu0 0.0
    %322 = vmatprep.subr.mxu0 0.0
    %323 = vmatpush1.msra.mxu0 0.0
    %324 = vmatprep.subr.mxu0 0.0
    %325 = vmatpush1.msra.mxu0 0.0
    %326 = vmatprep.subr.mxu0 0.0
    %327 = vmatpush1.msra.mxu0 0.0
    %328 = vmatprep.subr.mxu0 0.0
    %329 = vmatpush1.msra.mxu0 0.0
    %330 = vmatprep.subr.mxu0 0.0
    %331 = vmatpush1.msra.mxu0 0.0
    %332 = vmatprep.subr.mxu0 0.0
    %333 = vmatpush1.msra.mxu0 0.0
    %334 = vmatprep.subr.mxu0 0.0
    %335 = vmatpush1.msra.mxu0 0.0
    %336 = vmatprep.subr.mxu0 0.0
    %337 = vmatpush1.msra.mxu0 0.0
    %338 = vmatprep.subr.mxu0 0.0
    %339 = vmatpush1.msra.mxu0 0.0
    %340 = vmatprep.mubr.f32.mxu0 0.0
    %341 = vmatmul.mubr.f32.gmra.mrb[0].mxu0 %v271
    %v342 = vpop.f32.mrb[0].mxu0
    %v343 = vadd.f32 0.0, %v342
    %v344 = vpop.f32.mrb[0].mxu0
    %345 = vmatprep.mubr.f32.mxu0 0.0
    %346 = vmatmul.mubr.f32.gmra.mrb[0].mxu0 %v274
    %v347 = vpop.f32.mrb[0].mxu0
    %v348 = vadd.f32 0.0, %v347
    %v349 = vpop.f32.mrb[0].mxu0
    %350 = vdwg.mxu0
    %v351 = vmul.f32 %v35, %v343
    %v352 = vmul.f32 %v36, %v348
    %v353 = vld [vmem:[%s4] sm:$0x3]
    %vm354 = vcmask 130048
    %v356 = vsel %vm354, %v353, 0
    %358 = vmatprep.subr.mxu0 0.0
    %359 = vmatpush1.msra.mxu0 %v351
    %360 = vmatprep.subr.mxu0 0.0
    %361 = vmatpush1.msra.mxu0 %v352
    %362 = vmatprep.subr.mxu0 0.0
    %363 = vmatpush1.msra.mxu0 0.0
    %364 = vmatprep.subr.mxu0 0.0
    %365 = vmatpush1.msra.mxu0 0.0
    %366 = vmatprep.subr.mxu0 0.0
    %367 = vmatpush1.msra.mxu0 0.0
    %368 = vmatprep.subr.mxu0 0.0
    %369 = vmatpush1.msra.mxu0 0.0
    %370 = vmatprep.subr.mxu0 0.0
    %371 = vmatpush1.msra.mxu0 0.0
    %372 = vmatprep.subr.mxu0 0.0
    %373 = vmatpush1.msra.mxu0 0.0
    %374 = vmatprep.subr.mxu0 0.0
    %375 = vmatpush1.msra.mxu0 0.0
    %376 = vmatprep.subr.mxu0 0.0
    %377 = vmatpush1.msra.mxu0 0.0
    %378 = vmatprep.subr.mxu0 0.0
    %379 = vmatpush1.msra.mxu0 0.0
    %380 = vmatprep.subr.mxu0 0.0
    %381 = vmatpush1.msra.mxu0 0.0
    %382 = vmatprep.subr.mxu0 0.0
    %383 = vmatpush1.msra.mxu0 0.0
    %384 = vmatprep.subr.mxu0 0.0
    %385 = vmatpush1.msra.mxu0 0.0
    %386 = vmatprep.subr.mxu0 0.0
    %387 = vmatpush1.msra.mxu0 0.0
    %388 = vmatprep.subr.mxu0 0.0
    %389 = vmatpush1.msra.mxu0 0.0
    %390 = vmatprep.subr.mxu0 0.0
    %391 = vmatpush1.msra.mxu0 0.0
    %392 = vmatprep.subr.mxu0 0.0
    %393 = vmatpush1.msra.mxu0 0.0
    %394 = vmatprep.subr.mxu0 0.0
    %395 = vmatpush1.msra.mxu0 0.0
    %396 = vmatprep.subr.mxu0 0.0
    %397 = vmatpush1.msra.mxu0 0.0
    %398 = vmatprep.subr.mxu0 0.0
    %399 = vmatpush1.msra.mxu0 0.0
    %400 = vmatprep.subr.mxu0 0.0
    %401 = vmatpush1.msra.mxu0 0.0
    %402 = vmatprep.subr.mxu0 0.0
    %403 = vmatpush1.msra.mxu0 0.0
    %404 = vmatprep.subr.mxu0 0.0
    %405 = vmatpush1.msra.mxu0 0.0
    %406 = vmatprep.subr.mxu0 0.0
    %407 = vmatpush1.msra.mxu0 0.0
    %408 = vmatprep.subr.mxu0 0.0
    %409 = vmatpush1.msra.mxu0 0.0
    %410 = vmatprep.subr.mxu0 0.0
    %411 = vmatpush1.msra.mxu0 0.0
    %412 = vmatprep.subr.mxu0 0.0
    %413 = vmatpush1.msra.mxu0 0.0
    %414 = vmatprep.subr.mxu0 0.0
    %415 = vmatpush1.msra.mxu0 0.0
    %416 = vmatprep.subr.mxu0 0.0
    %417 = vmatpush1.msra.mxu0 0.0
    %418 = vmatprep.subr.mxu0 0.0
    %419 = vmatpush1.msra.mxu0 0.0
    %420 = vmatprep.subr.mxu0 0.0
    %421 = vmatpush1.msra.mxu0 0.0
    %422 = vmatprep.mubr.f32.mxu0 0.0
    %423 = vmatmul.mubr.f32.gmra.mrb[0].mxu0 %v356
    %v424 = vpop.f32.mrb[0].mxu0
    %v425 = vadd.f32 0.0, %v424
    %v426 = vpop.f32.mrb[0].mxu0
    %427 = vdwg.mxu0
    %vm428 = vcmask 254976
    %429 = vst.msk [vmem:[#allocation5] sm:$0x3] %vm428, %v425
    // Predicated region
    $region26: #{tpu_custom_call.1} parent=1 // pred_check
      _
    $region27: #{tpu_custom_call.1} parent=1 // pred_check_branch
      %431 = sbr.rel (0) target = $region29
    $region28: #{tpu_custom_call.1} parent=1 // pred_region
      %s433 = ssub.s32 32, 32
      %434 = vsyncadd [#allocation4], %s433
      %s436 = sshll.u32 [#allocation5], 4
      %s437 = int_to_ptr.vmem [resolvable:$true] %s436
      %439 = dma.vmem_to_hbm [thread:$0]  %s437, 32, %s5, [#allocation4]
    $region29: #{tpu_custom_call.1} parent=1 // pred_fallthru
      _
    // Predicated region
    $region30: #{tpu_custom_call.1} parent=1 // pred_check
      _
    $region31: #{tpu_custom_call.1} parent=1 // pred_check_branch
      %441 = sbr.rel (0) target = $region33
    $region32: #{tpu_custom_call.1} parent=1 // pred_region
      %442 = dma.done [#allocation4], 32
    $region33: #{tpu_custom_call.1} parent=1 // pred_fallthru
      _
    %443 = vsyncpa [#allocation3], 1
    %444 = vsyncpa [#allocation4], 1

</llo_original>
